<compile_context>
chip_gen: v7x
topology: tpu7x:2x2x1
jax: 0.10.0
libtpu: 0.0.40
codegen_flags: <defaults>
</compile_context>

<pallas_src>
import functools

import jax
import jax.numpy as jnp
import numpy as np
from jax import lax
from jax.experimental import pallas as pl
from jax.experimental.pallas import tpu as pltpu


# -----------------------------------------------------------------------------
# Pallas kernel: fused (adapter hypernet + modulated MLP) forward, one batch tile
# -----------------------------------------------------------------------------
def _softq_adapter_kernel(
    x_ref, a_ref,                       # activations (TB, obs_dim), (TB, act_dim)
    w1x_ref, w1a_ref, b1_ref,           # layer 1 base (w1 split into feat/act parts)
    wad_ref, bad_ref,                   # fused adapter hypernet [g1|s1|g2|s2]
    w2_ref, b2_ref,                     # layer 2 base
    w3_ref, b3_ref,                     # output head (w3 as (1, H2) row, b3 in SMEM)
    out_ref,                            # (1, TB) lane-dense Q row
):
    feat_dim = w1x_ref.shape[0]
    h1_dim = w1x_ref.shape[1]
    h2_dim = w2_ref.shape[1]

    x = x_ref[...].astype(jnp.float32)          # (TB, obs_dim)
    a = a_ref[...].astype(jnp.float32)          # (TB, act_dim)
    feats = x[:, :feat_dim]                     # (TB, obs_dim - ctx_dim)
    ctx = x[:, feat_dim:]                       # (TB, ctx_dim)  (sliced in VMEM)

    # ---- fused adapter hypernet: single (ctx_dim x 2*(H1+H2)) matmul ---------
    # layout [scale1 | shift1 | scale2 | shift2]; "+1" folded into scale biases.
    ad = jnp.dot(ctx, wad_ref[...], preferred_element_type=jnp.float32) + bad_ref[...]
    g1 = ad[:, :h1_dim]
    s1 = ad[:, h1_dim:2 * h1_dim]
    g2 = ad[:, 2 * h1_dim:2 * h1_dim + h2_dim]
    s2 = ad[:, 2 * h1_dim + h2_dim:]

    # ---- layer 1: split base matmul (no HBM concat) + FiLM + ReLU ------------
    h1 = (jnp.dot(feats, w1x_ref[...], preferred_element_type=jnp.float32)
          + jnp.dot(a, w1a_ref[...], preferred_element_type=jnp.float32)
          + b1_ref[...])
    h1 = jnp.maximum(h1 * g1 + s1, 0.0)

    # ---- layer 2: base matmul + FiLM + ReLU ----------------------------------
    h2 = jnp.dot(h1, w2_ref[...], preferred_element_type=jnp.float32) + b2_ref[...]
    h2 = jnp.maximum(h2 * g2 + s2, 0.0)

    # ---- output head: contract hidden dim -> (1, TB) lane-dense row ----------
    q = lax.dot_general(w3_ref[...], h2,
                        dimension_numbers=(((1,), (1,)), ((), ())),
                        preferred_element_type=jnp.float32)
    out_ref[...] = (q + b3_ref[0]).astype(out_ref.dtype)


# -----------------------------------------------------------------------------
# Offline parameter packing (done once, outside the forward pass)
# -----------------------------------------------------------------------------
def pack_params(raw, *, feat_dim):
    """Pack raw per-layer params into the fused kernel layout."""
    w1 = raw["w1"]
    return {
        "w1x": w1[:feat_dim],                                           # (feat, H1)
        "w1a": w1[feat_dim:],                                           # (act,  H1)
        "b1": raw["b1"],                                                # (1, H1)
        "wad": jnp.concatenate(
            [raw["gw1"], raw["bw1"], raw["gw2"], raw["bw2"]], axis=1),  # (cdim, 2H1+2H2)
        "bad": jnp.concatenate(
            [raw["gb1"] + 1.0, raw["bb1"], raw["gb2"] + 1.0, raw["bb2"]], axis=1),
        "w2": raw["w2"],                                                # (H1, H2)
        "b2": raw["b2"],                                                # (1, H2)
        "w3r": raw["w3"].reshape(1, -1),                                # (1, H2)
        "b3": raw["b3"].reshape(-1),                                    # (1,)  -> SMEM
    }


# -----------------------------------------------------------------------------
# Wrapper: batch-tiled, pipelined pallas_call
# -----------------------------------------------------------------------------
@functools.partial(jax.jit, static_argnames=("context_dim",))
def soft_q_network_adapter_forward(x, a, packed, *, context_dim):
    """x: (B, obs_dim) incl. trailing context dims.  a: (B, act_dim)."""
    if context_dim <= 0:
        raise ValueError("context_dim must be a positive integer")

    B, obs_dim = x.shape
    act_dim = a.shape[1]
    feat_dim = obs_dim - context_dim
    H1 = packed["w1x"].shape[1]
    H2 = packed["w2"].shape[1]
    AD = packed["wad"].shape[1]

    # Lane-aligned batch padding; pick the largest tile (<=1024) that divides it
    # so the per-step pipeline overhead amortizes and DMA overlaps compute.
    B_pad = ((B + 127) // 128) * 128
    TB = 128
    for cand in (1024, 512, 256, 128):
        if cand <= B_pad and B_pad % cand == 0:
            TB = cand
            break
    if B_pad != B:
        pad = B_pad - B
        x = jnp.pad(x, ((0, pad), (0, 0)))
        a = jnp.pad(a, ((0, pad), (0, 0)))
    num_tiles = B_pad // TB

    in_specs = [
        pl.BlockSpec((TB, obs_dim), lambda i: (i, 0)),          # x tile
        pl.BlockSpec((TB, act_dim), lambda i: (i, 0)),          # a tile
        pl.BlockSpec((feat_dim, H1), lambda i: (0, 0)),         # w1 (feat part)
        pl.BlockSpec((act_dim, H1), lambda i: (0, 0)),          # w1 (action part)
        pl.BlockSpec((1, H1), lambda i: (0, 0)),                # b1
        pl.BlockSpec((context_dim, AD), lambda i: (0, 0)),      # fused adapter W
        pl.BlockSpec((1, AD), lambda i: (0, 0)),                # fused adapter b
        pl.BlockSpec((H1, H2), lambda i: (0, 0)),               # w2
        pl.BlockSpec((1, H2), lambda i: (0, 0)),                # b2
        pl.BlockSpec((1, H2), lambda i: (0, 0)),                # w3 (row)
        pl.BlockSpec(memory_space=pltpu.MemorySpace.SMEM),      # b3 scalar
    ]
    # Lane-dense output: one row per tile, batch on lanes.
    out_spec = pl.BlockSpec((1, TB), lambda i: (0, i))

    n_param = sum(int(np.prod(p.shape)) for p in jax.tree_util.tree_leaves(packed))
    flops = 2 * B_pad * (feat_dim * H1 + act_dim * H1 + context_dim * AD
                         + H1 * H2 + H2)
    bytes_accessed = 4 * (B_pad * (obs_dim + act_dim + 1) + n_param)

    out = pl.pallas_call(
        _softq_adapter_kernel,
        grid=(num_tiles,),
        in_specs=in_specs,
        out_specs=out_spec,
        out_shape=jax.ShapeDtypeStruct((1, B_pad), jnp.float32),
        cost_estimate=pl.CostEstimate(
            flops=flops, transcendentals=0, bytes_accessed=bytes_accessed),
        compiler_params=pltpu.CompilerParams(
            dimension_semantics=("parallel",),
            vmem_limit_bytes=32 * 1024 * 1024),
    )(
        x, a,
        packed["w1x"], packed["w1a"], packed["b1"],
        packed["wad"], packed["bad"],
        packed["w2"], packed["b2"],
        packed["w3r"], packed["b3"],
    )
    return out[0, :B].reshape(B, 1)


# -----------------------------------------------------------------------------
# Deterministic parameter init (PyTorch-Linear-style uniform(+-1/sqrt(fan_in)))
# -----------------------------------------------------------------------------
def init_params(key, ins, context_dim, net_arch):
    H1, H2 = net_arch
    ks = jax.random.split(key, 16)

    def lin(kw, kb, fan_in, fan_out):
        bound = 1.0 / jnp.sqrt(float(fan_in))
        w = jax.random.uniform(kw, (fan_in, fan_out), jnp.float32, -bound, bound)
        b = jax.random.uniform(kb, (1, fan_out), jnp.float32, -bound, bound)
        return w, b

    p = {}
    p["w1"], p["b1"] = lin(ks[0], ks[1], ins, H1)
    p["gw1"], p["gb1"] = lin(ks[2], ks[3], context_dim, H1)
    p["bw1"], p["bb1"] = lin(ks[4], ks[5], context_dim, H1)
    p["w2"], p["b2"] = lin(ks[6], ks[7], H1, H2)
    p["gw2"], p["gb2"] = lin(ks[8], ks[9], context_dim, H2)
    p["bw2"], p["bb2"] = lin(ks[10], ks[11], context_dim, H2)
    p["w3"], p["b3"] = lin(ks[12], ks[13], H2, 1)
    return p


# -----------------------------------------------------------------------------
# Pure-JAX reference (same math, unfused) for a correctness check
# -----------------------------------------------------------------------------
def reference_forward(x, a, raw, context_dim):
    ctx = x[:, -context_dim:]
    feats = x[:, :-context_dim]
    xa = jnp.concatenate([feats, a], axis=1)
    g1 = jnp.dot(ctx, raw["gw1"]) + raw["gb1"]
    s1 = jnp.dot(ctx, raw["bw1"]) + raw["bb1"]
    h1 = jnp.dot(xa, raw["w1"]) + raw["b1"]
    h1 = jnp.maximum(h1 * (1.0 + g1) + s1, 0.0)
    g2 = jnp.dot(ctx, raw["gw2"]) + raw["gb2"]
    s2 = jnp.dot(ctx, raw["bw2"]) + raw["bb2"]
    h2 = jnp.dot(h1, raw["w2"]) + raw["b2"]
    h2 = jnp.maximum(h2 * (1.0 + g2) + s2, 0.0)
    return jnp.dot(h2, raw["w3"]) + raw["b3"]


if __name__ == "__main__":
    # Small shapes consistent with the module:
    #   obs_dim = 11 (last 3 are context), act_dim = 4
    #   ins = 11 + 4 - 3 = 12, net_arch = [32, 32], output = 1
    B = 8
    OBS_DIM = 11
    ACT_DIM = 4
    CONTEXT_DIM = 3
    NET_ARCH = [32, 32]
    INS = OBS_DIM + ACT_DIM - CONTEXT_DIM

    key = jax.random.PRNGKey(0)
    kx, ka, kp = jax.random.split(key, 3)
    x = jax.random.normal(kx, (B, OBS_DIM), jnp.float32)
    a = jax.random.normal(ka, (B, ACT_DIM), jnp.float32)
    raw = init_params(kp, INS, CONTEXT_DIM, NET_ARCH)
    packed = pack_params(raw, feat_dim=OBS_DIM - CONTEXT_DIM)

    q = soft_q_network_adapter_forward(x, a, packed, context_dim=CONTEXT_DIM)
    q = jax.block_until_ready(q)
    assert q.shape == (B, 1) and q.dtype == jnp.float32

    q_ref = np.asarray(reference_forward(x, a, raw, CONTEXT_DIM))
    assert np.allclose(np.asarray(q), q_ref, atol=5e-3, rtol=5e-3), (
        float(np.max(np.abs(np.asarray(q) - q_ref))))
    print("KERNEL_OK")
</pallas_src>

<mosaic_0001>
module attributes {stable_mosaic.version = 11 : i64} {
  func.func @_softq_adapter_kernel(%arg0: i32, %arg1: memref<128x11xf32, #tpu.memory_space<vmem>>, %arg2: memref<128x4xf32, #tpu.memory_space<vmem>>, %arg3: memref<8x32xf32, #tpu.memory_space<vmem>>, %arg4: memref<4x32xf32, #tpu.memory_space<vmem>>, %arg5: memref<1x32xf32, #tpu.memory_space<vmem>>, %arg6: memref<3x128xf32, #tpu.memory_space<vmem>>, %arg7: memref<1x128xf32, #tpu.memory_space<vmem>>, %arg8: memref<32x32xf32, #tpu.memory_space<vmem>>, %arg9: memref<1x32xf32, #tpu.memory_space<vmem>>, %arg10: memref<1x32xf32, #tpu.memory_space<vmem>>, %arg11: memref<1xf32, #tpu.memory_space<smem>>, %arg12: memref<1x128xf32, #tpu.memory_space<vmem>>) attributes {dimension_semantics = [#tpu.dimension_semantics<parallel>], iteration_bounds = array<i64: 1>, scalar_prefetch = 0 : i64, scratch_operands = 0 : i64, tpu.core_type = #tpu.core_type<tc>, window_params = [{transform_indices = @transform_0, window_bounds = array<i64: 128, 11>}, {transform_indices = @transform_1, window_bounds = array<i64: 128, 4>}, {pipeline_mode = #tpu.pipeline_mode<synchronous>, transform_indices = @transform_2, window_bounds = array<i64: 8, 32>}, {pipeline_mode = #tpu.pipeline_mode<synchronous>, transform_indices = @transform_3, window_bounds = array<i64: 4, 32>}, {pipeline_mode = #tpu.pipeline_mode<synchronous>, transform_indices = @transform_4, window_bounds = array<i64: 1, 32>}, {pipeline_mode = #tpu.pipeline_mode<synchronous>, transform_indices = @transform_5, window_bounds = array<i64: 3, 128>}, {pipeline_mode = #tpu.pipeline_mode<synchronous>, transform_indices = @transform_6, window_bounds = array<i64: 1, 128>}, {pipeline_mode = #tpu.pipeline_mode<synchronous>, transform_indices = @transform_7, window_bounds = array<i64: 32, 32>}, {pipeline_mode = #tpu.pipeline_mode<synchronous>, transform_indices = @transform_8, window_bounds = array<i64: 1, 32>}, {pipeline_mode = #tpu.pipeline_mode<synchronous>, transform_indices = @transform_9, window_bounds = array<i64: 1, 32>}, {transform_indices = @transform_10, window_bounds = array<i64: 1>}, {transform_indices = @transform_11, window_bounds = array<i64: 1, 128>}]} {
    %c0 = arith.constant 0 : index
    %c0_0 = arith.constant 0 : index
    %0 = vector.load %arg1[%c0, %c0_0] : memref<128x11xf32, #tpu.memory_space<vmem>>, vector<128x11xf32>
    %c0_1 = arith.constant 0 : index
    %c0_2 = arith.constant 0 : index
    %1 = vector.load %arg2[%c0_1, %c0_2] : memref<128x4xf32, #tpu.memory_space<vmem>>, vector<128x4xf32>
    %2 = vector.extract_strided_slice %0 {offsets = [0, 0], sizes = [128, 8], strides = [1, 1]} : vector<128x11xf32> to vector<128x8xf32>
    %3 = vector.extract_strided_slice %0 {offsets = [0, 8], sizes = [128, 3], strides = [1, 1]} : vector<128x11xf32> to vector<128x3xf32>
    %c0_3 = arith.constant 0 : index
    %c0_4 = arith.constant 0 : index
    %4 = vector.load %arg6[%c0_3, %c0_4] : memref<3x128xf32, #tpu.memory_space<vmem>>, vector<3x128xf32>
    %cst = arith.constant dense<0.000000e+00> : vector<128x128xf32>
    %5 = tpu.matmul %3, %4, %cst {dimension_numbers = #tpu.dot_dimension_numbers<[1], [0], [0], [1], [0, 0, 1, 1], [], []>} : vector<128x3xf32>, vector<3x128xf32>, vector<128x128xf32> -> vector<128x128xf32>
    %c0_5 = arith.constant 0 : index
    %c0_6 = arith.constant 0 : index
    %6 = vector.load %arg7[%c0_5, %c0_6] : memref<1x128xf32, #tpu.memory_space<vmem>>, vector<1x128xf32>
    %7 = vector.broadcast %6 : vector<1x128xf32> to vector<128x128xf32>
    %8 = arith.addf %5, %7 : vector<128x128xf32>
    %9 = vector.extract_strided_slice %8 {offsets = [0, 0], sizes = [128, 32], strides = [1, 1]} : vector<128x128xf32> to vector<128x32xf32>
    %10 = vector.extract_strided_slice %8 {offsets = [0, 32], sizes = [128, 32], strides = [1, 1]} : vector<128x128xf32> to vector<128x32xf32>
    %11 = vector.extract_strided_slice %8 {offsets = [0, 64], sizes = [128, 32], strides = [1, 1]} : vector<128x128xf32> to vector<128x32xf32>
    %12 = vector.extract_strided_slice %8 {offsets = [0, 96], sizes = [128, 32], strides = [1, 1]} : vector<128x128xf32> to vector<128x32xf32>
    %c0_7 = arith.constant 0 : index
    %c0_8 = arith.constant 0 : index
    %13 = vector.load %arg3[%c0_7, %c0_8] : memref<8x32xf32, #tpu.memory_space<vmem>>, vector<8x32xf32>
    %cst_9 = arith.constant dense<0.000000e+00> : vector<128x32xf32>
    %14 = tpu.matmul %2, %13, %cst_9 {dimension_numbers = #tpu.dot_dimension_numbers<[1], [0], [0], [1], [0, 0, 1, 1], [], []>} : vector<128x8xf32>, vector<8x32xf32>, vector<128x32xf32> -> vector<128x32xf32>
    %c0_10 = arith.constant 0 : index
    %c0_11 = arith.constant 0 : index
    %15 = vector.load %arg4[%c0_10, %c0_11] : memref<4x32xf32, #tpu.memory_space<vmem>>, vector<4x32xf32>
    %cst_12 = arith.constant dense<0.000000e+00> : vector<128x32xf32>
    %16 = tpu.matmul %1, %15, %cst_12 {dimension_numbers = #tpu.dot_dimension_numbers<[1], [0], [0], [1], [0, 0, 1, 1], [], []>} : vector<128x4xf32>, vector<4x32xf32>, vector<128x32xf32> -> vector<128x32xf32>
    %17 = arith.addf %14, %16 : vector<128x32xf32>
    %c0_13 = arith.constant 0 : index
    %c0_14 = arith.constant 0 : index
    %18 = vector.load %arg5[%c0_13, %c0_14] : memref<1x32xf32, #tpu.memory_space<vmem>>, vector<1x32xf32>
    %19 = vector.broadcast %18 : vector<1x32xf32> to vector<128x32xf32>
    %20 = arith.addf %17, %19 : vector<128x32xf32>
    %21 = arith.mulf %20, %9 : vector<128x32xf32>
    %22 = arith.addf %21, %10 : vector<128x32xf32>
    %cst_15 = arith.constant 0.000000e+00 : f32
    %23 = vector.broadcast %cst_15 : f32 to vector<128x32xf32>
    %24 = arith.maximumf %22, %23 : vector<128x32xf32>
    %c0_16 = arith.constant 0 : index
    %c0_17 = arith.constant 0 : index
    %25 = vector.load %arg8[%c0_16, %c0_17] : memref<32x32xf32, #tpu.memory_space<vmem>>, vector<32x32xf32>
    %cst_18 = arith.constant dense<0.000000e+00> : vector<128x32xf32>
    %26 = tpu.matmul %24, %25, %cst_18 {dimension_numbers = #tpu.dot_dimension_numbers<[1], [0], [0], [1], [0, 0, 1, 1], [], []>} : vector<128x32xf32>, vector<32x32xf32>, vector<128x32xf32> -> vector<128x32xf32>
    %c0_19 = arith.constant 0 : index
    %c0_20 = arith.constant 0 : index
    %27 = vector.load %arg9[%c0_19, %c0_20] : memref<1x32xf32, #tpu.memory_space<vmem>>, vector<1x32xf32>
    %28 = vector.broadcast %27 : vector<1x32xf32> to vector<128x32xf32>
    %29 = arith.addf %26, %28 : vector<128x32xf32>
    %30 = arith.mulf %29, %11 : vector<128x32xf32>
    %31 = arith.addf %30, %12 : vector<128x32xf32>
    %cst_21 = arith.constant 0.000000e+00 : f32
    %32 = vector.broadcast %cst_21 : f32 to vector<128x32xf32>
    %33 = arith.maximumf %31, %32 : vector<128x32xf32>
    %c0_22 = arith.constant 0 : index
    %c0_23 = arith.constant 0 : index
    %34 = vector.load %arg10[%c0_22, %c0_23] : memref<1x32xf32, #tpu.memory_space<vmem>>, vector<1x32xf32>
    %cst_24 = arith.constant dense<0.000000e+00> : vector<1x128xf32>
    %35 = tpu.matmul %34, %33, %cst_24 {dimension_numbers = #tpu.dot_dimension_numbers<[1], [1], [0], [0], [0, 0, 1, 0], [], []>} : vector<1x32xf32>, vector<128x32xf32>, vector<1x128xf32> -> vector<1x128xf32>
    %c0_25 = arith.constant 0 : index
    %36 = memref.load %arg11[%c0_25] : memref<1xf32, #tpu.memory_space<smem>>
    %37 = vector.broadcast %36 : f32 to vector<1x128xf32>
    %38 = arith.addf %35, %37 : vector<1x128xf32>
    %c0_26 = arith.constant 0 : index
    %c0_27 = arith.constant 0 : index
    %39 = vector.load %arg12[%c0_26, %c0_27] : memref<1x128xf32, #tpu.memory_space<vmem>>, vector<1x128xf32>
    tpu.vector_store %arg12[%c0_26, %c0_27], %38 {strides = array<i32>} : memref<1x128xf32, #tpu.memory_space<vmem>>, vector<1x128xf32>,
    return
  }
  func.func @transform_0(%arg0: i32) -> (i32, i32) {
    %c0_i32 = arith.constant 0 : i32
    %c0_i32_0 = arith.constant 0 : i32
    return %arg0, %c0_i32 : i32, i32
  }
  func.func @transform_1(%arg0: i32) -> (i32, i32) {
    %c0_i32 = arith.constant 0 : i32
    %c0_i32_0 = arith.constant 0 : i32
    return %arg0, %c0_i32 : i32, i32
  }
  func.func @transform_2(%arg0: i32) -> (i32, i32) {
    %c0_i32 = arith.constant 0 : i32
    %c0_i32_0 = arith.constant 0 : i32
    %c0_i32_1 = arith.constant 0 : i32
    return %c0_i32, %c0_i32_0 : i32, i32
  }
  func.func @transform_3(%arg0: i32) -> (i32, i32) {
    %c0_i32 = arith.constant 0 : i32
    %c0_i32_0 = arith.constant 0 : i32
    %c0_i32_1 = arith.constant 0 : i32
    return %c0_i32, %c0_i32_0 : i32, i32
  }
  func.func @transform_4(%arg0: i32) -> (i32, i32) {
    %c0_i32 = arith.constant 0 : i32
    %c0_i32_0 = arith.constant 0 : i32
    %c0_i32_1 = arith.constant 0 : i32
    return %c0_i32, %c0_i32_0 : i32, i32
  }
  func.func @transform_5(%arg0: i32) -> (i32, i32) {
    %c0_i32 = arith.constant 0 : i32
    %c0_i32_0 = arith.constant 0 : i32
    %c0_i32_1 = arith.constant 0 : i32
    return %c0_i32, %c0_i32_0 : i32, i32
  }
  func.func @transform_6(%arg0: i32) -> (i32, i32) {
    %c0_i32 = arith.constant 0 : i32
    %c0_i32_0 = arith.constant 0 : i32
    %c0_i32_1 = arith.constant 0 : i32
    return %c0_i32, %c0_i32_0 : i32, i32
  }
  func.func @transform_7(%arg0: i32) -> (i32, i32) {
    %c0_i32 = arith.constant 0 : i32
    %c0_i32_0 = arith.constant 0 : i32
    %c0_i32_1 = arith.constant 0 : i32
    return %c0_i32, %c0_i32_0 : i32, i32
  }
  func.func @transform_8(%arg0: i32) -> (i32, i32) {
    %c0_i32 = arith.constant 0 : i32
    %c0_i32_0 = arith.constant 0 : i32
    %c0_i32_1 = arith.constant 0 : i32
    return %c0_i32, %c0_i32_0 : i32, i32
  }
  func.func @transform_9(%arg0: i32) -> (i32, i32) {
    %c0_i32 = arith.constant 0 : i32
    %c0_i32_0 = arith.constant 0 : i32
    %c0_i32_1 = arith.constant 0 : i32
    return %c0_i32, %c0_i32_0 : i32, i32
  }
  func.func @transform_10(%arg0: i32) -> i32 {
    %c0_i32 = arith.constant 0 : i32
    %c0_i32_0 = arith.constant 0 : i32
    return %c0_i32 : i32
  }
  func.func @transform_11(%arg0: i32) -> (i32, i32) {
    %c0_i32 = arith.constant 0 : i32
    %c0_i32_0 = arith.constant 0 : i32
    return %c0_i32, %arg0 : i32, i32
  }
}

</mosaic_0001>

<llo_original>
// kernel: soft_q_network_adapter_forward.1
$region0: #{soft_q_network_adapter_forward.1}
  #allocation0 [shape = 'u32[]', space=smem, size = 0x4, offset = 0x4, fixed_abs, tag = 'smem constant byte address 0x4 - core index']
  #allocation1 [shape = 'u32[144,128]{1,0:T(1,128)}', space=vmem, size = 0x12000, scoped, tag = 'internal scratch']
  #allocation2 [shape = 'f32[1]{0:T(128)S(6)}', space=smem, size = 0x200, scoped, tag = 'scoped memory for soft_q_network_adapter_forward.1']
  %s0 = inlined_call_operand.vmem [shape: f32[128,11], index: 0, kind: input, shape index: {}]
  %s1 = inlined_call_operand.vmem [shape: f32[128,4], index: 1, kind: input, shape index: {}]
  %s2 = inlined_call_operand.vmem [shape: f32[8,32], index: 2, kind: input, shape index: {}]
  %s3 = inlined_call_operand.vmem [shape: f32[4,32], index: 3, kind: input, shape index: {}]
  %s4 = inlined_call_operand.vmem [shape: f32[1,32], index: 4, kind: input, shape index: {}]
  %s5 = inlined_call_operand.vmem [shape: f32[3,128], index: 5, kind: input, shape index: {}]
  %s6 = inlined_call_operand.vmem [shape: f32[1,128], index: 6, kind: input, shape index: {}]
  %s7 = inlined_call_operand.vmem [shape: f32[32,32], index: 7, kind: input, shape index: {}]
  %s8 = inlined_call_operand.vmem [shape: f32[1,32], index: 8, kind: input, shape index: {}]
  %s9 = inlined_call_operand.vmem [shape: f32[1,32], index: 9, kind: input, shape index: {}]
  %s10 = inlined_call_operand.<no memory space> [shape: f32[1], index: 10, kind: input, shape index: {}]
  %s11 = inlined_call_operand.vmem [shape: f32[1,128], index: 11, kind: output, shape index: {}]
  %s12 = sld [smem:[#allocation0]]
  $region54: #{soft_q_network_adapter_forward.1} parent=0
    _
  %s14 = ssub.s32 1, %s12
  %s15 = scalar_select 0, %s14, %s12
  %16 = sst [smem:[#allocation2]] %s10
  // Predicated region
  $region2: #{soft_q_network_adapter_forward.1} parent=0 // pred_check
    _
  $region3: #{soft_q_network_adapter_forward.1} parent=0 // pred_check_branch
    %18 = sbr.rel (0) target = $region5
  $region4: #{soft_q_network_adapter_forward.1} parent=0 // pred_region
    _
  $region5: #{soft_q_network_adapter_forward.1} parent=0 // pred_fallthru
    _
  // Predicated region
  $region6: #{soft_q_network_adapter_forward.1} parent=0 // pred_check
    _
  $region7: #{soft_q_network_adapter_forward.1} parent=0 // pred_check_branch
    %20 = sbr.rel (0) target = $region9
  $region8: #{soft_q_network_adapter_forward.1} parent=0 // pred_region
    _
  $region9: #{soft_q_network_adapter_forward.1} parent=0 // pred_fallthru
    _
  // Predicated region
  $region10: #{soft_q_network_adapter_forward.1} parent=0 // pred_check
    _
  $region11: #{soft_q_network_adapter_forward.1} parent=0 // pred_check_branch
    %22 = sbr.rel (0) target = $region13
  $region12: #{soft_q_network_adapter_forward.1} parent=0 // pred_region
    _
  $region13: #{soft_q_network_adapter_forward.1} parent=0 // pred_fallthru
    _
  // Predicated region
  $region14: #{soft_q_network_adapter_forward.1} parent=0 // pred_check
    _
  $region15: #{soft_q_network_adapter_forward.1} parent=0 // pred_check_branch
    %24 = sbr.rel (0) target = $region17
  $region16: #{soft_q_network_adapter_forward.1} parent=0 // pred_region
    _
  $region17: #{soft_q_network_adapter_forward.1} parent=0 // pred_fallthru
    _
  // Predicated region
  $region18: #{soft_q_network_adapter_forward.1} parent=0 // pred_check
    _
  $region19: #{soft_q_network_adapter_forward.1} parent=0 // pred_check_branch
    %26 = sbr.rel (0) target = $region21
  $region20: #{soft_q_network_adapter_forward.1} parent=0 // pred_region
    _
  $region21: #{soft_q_network_adapter_forward.1} parent=0 // pred_fallthru
    _
  // Predicated region
  $region22: #{soft_q_network_adapter_forward.1} parent=0 // pred_check
    _
  $region23: #{soft_q_network_adapter_forward.1} parent=0 // pred_check_branch
    %28 = sbr.rel (0) target = $region25
  $region24: #{soft_q_network_adapter_forward.1} parent=0 // pred_region
    _
  $region25: #{soft_q_network_adapter_forward.1} parent=0 // pred_fallthru
    _
  // Predicated region
  $region26: #{soft_q_network_adapter_forward.1} parent=0 // pred_check
    _
  $region27: #{soft_q_network_adapter_forward.1} parent=0 // pred_check_branch
    %30 = sbr.rel (0) target = $region29
  $region28: #{soft_q_network_adapter_forward.1} parent=0 // pred_region
    _
  $region29: #{soft_q_network_adapter_forward.1} parent=0 // pred_fallthru
    _
  // Predicated region
  $region30: #{soft_q_network_adapter_forward.1} parent=0 // pred_check
    _
  $region31: #{soft_q_network_adapter_forward.1} parent=0 // pred_check_branch
    %32 = sbr.rel (0) target = $region33
  $region32: #{soft_q_network_adapter_forward.1} parent=0 // pred_region
    _
  $region33: #{soft_q_network_adapter_forward.1} parent=0 // pred_fallthru
    _
  // Predicated region
  $region34: #{soft_q_network_adapter_forward.1} parent=0 // pred_check
    _
  $region35: #{soft_q_network_adapter_forward.1} parent=0 // pred_check_branch
    %34 = sbr.rel (0) target = $region37
  $region36: #{soft_q_network_adapter_forward.1} parent=0 // pred_region
    _
  $region37: #{soft_q_network_adapter_forward.1} parent=0 // pred_fallthru
    _
  // Predicated region
  $region38: #{soft_q_network_adapter_forward.1} parent=0 // pred_check
    _
  $region39: #{soft_q_network_adapter_forward.1} parent=0 // pred_check_branch
    %36 = sbr.rel (0) target = $region41
  $region40: #{soft_q_network_adapter_forward.1} parent=0 // pred_region
    _
  $region41: #{soft_q_network_adapter_forward.1} parent=0 // pred_fallthru
    _
  // Predicated region
  $region42: #{soft_q_network_adapter_forward.1} parent=0 // pred_check
    _
  $region43: #{soft_q_network_adapter_forward.1} parent=0 // pred_check_branch
    %38 = sbr.rel (0) target = $region45
  $region44: #{soft_q_network_adapter_forward.1} parent=0 // pred_region
    _
  $region45: #{soft_q_network_adapter_forward.1} parent=0 // pred_fallthru
    _
  %v39 = vld [vmem:[%s0] sm:$0xff]
  %v40 = vld [vmem:[%s0 + $0x8] sm:$0xff]
  %v41 = vld [vmem:[%s0 + $0x10] sm:$0xff]
  %v42 = vld [vmem:[%s0 + $0x18] sm:$0xff]
  %v43 = vld [vmem:[%s0 + $0x20] sm:$0xff]
  %v44 = vld [vmem:[%s0 + $0x28] sm:$0xff]
  %v45 = vld [vmem:[%s0 + $0x30] sm:$0xff]
  %v46 = vld [vmem:[%s0 + $0x38] sm:$0xff]
  %v47 = vld [vmem:[%s0 + $0x40] sm:$0xff]
  %v48 = vld [vmem:[%s0 + $0x48] sm:$0xff]
  %v49 = vld [vmem:[%s0 + $0x50] sm:$0xff]
  %v50 = vld [vmem:[%s0 + $0x58] sm:$0xff]
  %v51 = vld [vmem:[%s0 + $0x60] sm:$0xff]
  %v52 = vld [vmem:[%s0 + $0x68] sm:$0xff]
  %v53 = vld [vmem:[%s0 + $0x70] sm:$0xff]
  %v54 = vld [vmem:[%s0 + $0x78] sm:$0xff]
  %v55 = vld [vmem:[%s1] sm:$0xff]
  %v56 = vld [vmem:[%s1 + $0x8] sm:$0xff]
  %v57 = vld [vmem:[%s1 + $0x10] sm:$0xff]
  %v58 = vld [vmem:[%s1 + $0x18] sm:$0xff]
  %v59 = vld [vmem:[%s1 + $0x20] sm:$0xff]
  %v60 = vld [vmem:[%s1 + $0x28] sm:$0xff]
  %v61 = vld [vmem:[%s1 + $0x30] sm:$0xff]
  %v62 = vld [vmem:[%s1 + $0x38] sm:$0xff]
  %v63 = vld [vmem:[%s1 + $0x40] sm:$0xff]
  %v64 = vld [vmem:[%s1 + $0x48] sm:$0xff]
  %v65 = vld [vmem:[%s1 + $0x50] sm:$0xff]
  %v66 = vld [vmem:[%s1 + $0x58] sm:$0xff]
  %v67 = vld [vmem:[%s1 + $0x60] sm:$0xff]
  %v68 = vld [vmem:[%s1 + $0x68] sm:$0xff]
  %v69 = vld [vmem:[%s1 + $0x70] sm:$0xff]
  %v70 = vld [vmem:[%s1 + $0x78] sm:$0xff]
  %v71 = vld [vmem:[%s5] sm:$0x7]
  %v72 = vld [vmem:[%s6] sm:$0x1]
  %v74 = vlaneseq
  %v75 = vshrl.u32 %v74, 7
  %v76 = vsub.s32 0, %v75
  %v77 = vrot.slane %v72, %v76
  %95 = vrot.lane.b32.xlu0 %v39, 120
  %v96 = vpop.permute.xlu0 %95
  %97 = vrot.lane.b32.xlu0 %v40, 120
  %v98 = vpop.permute.xlu0 %97
  %99 = vrot.lane.b32.xlu0 %v41, 120
  %v100 = vpop.permute.xlu0 %99
  %101 = vrot.lane.b32.xlu0 %v42, 120
  %v102 = vpop.permute.xlu0 %101
  %103 = vrot.lane.b32.xlu0 %v43, 120
  %v104 = vpop.permute.xlu0 %103
  %105 = vrot.lane.b32.xlu0 %v44, 120
  %v106 = vpop.permute.xlu0 %105
  %107 = vrot.lane.b32.xlu0 %v45, 120
  %v108 = vpop.permute.xlu0 %107
  %109 = vrot.lane.b32.xlu0 %v46, 120
  %v110 = vpop.permute.xlu0 %109
  %111 = vrot.lane.b32.xlu0 %v47, 120
  %v112 = vpop.permute.xlu0 %111
  %113 = vrot.lane.b32.xlu0 %v48, 120
  %v114 = vpop.permute.xlu0 %113
  %115 = vrot.lane.b32.xlu0 %v49, 120
  %v116 = vpop.permute.xlu0 %115
  %117 = vrot.lane.b32.xlu0 %v50, 120
  %v118 = vpop.permute.xlu0 %117
  %119 = vrot.lane.b32.xlu0 %v51, 120
  %v120 = vpop.permute.xlu0 %119
  %121 = vrot.lane.b32.xlu0 %v52, 120
  %v122 = vpop.permute.xlu0 %121
  %123 = vrot.lane.b32.xlu0 %v53, 120
  %v124 = vpop.permute.xlu0 %123
  %125 = vrot.lane.b32.xlu0 %v54, 120
  %v126 = vpop.permute.xlu0 %125
  %vm127 = vcmask 23552
  %v128 = vsel %vm127, %v96, 0
  %v130 = vsel %vm127, %v98, 0
  %v132 = vsel %vm127, %v100, 0
  %v134 = vsel %vm127, %v102, 0
  %v136 = vsel %vm127, %v104, 0
  %v138 = vsel %vm127, %v106, 0
  %v140 = vsel %vm127, %v108, 0
  %v142 = vsel %vm127, %v110, 0
  %v144 = vsel %vm127, %v112, 0
  %v146 = vsel %vm127, %v114, 0
  %v148 = vsel %vm127, %v116, 0
  %v150 = vsel %vm127, %v118, 0
  %v152 = vsel %vm127, %v120, 0
  %v154 = vsel %vm127, %v122, 0
  %v156 = vsel %vm127, %v124, 0
  %v158 = vsel %vm127, %v126, 0
  %vm160 = vcmask 1042432
  %v162 = vsel %vm160, %v71, 0
  %164 = vmatprep.subr.mxu0 0.0
  %165 = vmatpush1.msra.mxu0 %v162
  %166 = vmatprep.subr.mxu0 0.0
  %167 = vmatpush1.msra.mxu0 0.0
  %168 = vmatprep.subr.mxu0 0.0
  %169 = vmatpush1.msra.mxu0 0.0
  %170 = vmatprep.subr.mxu0 0.0
  %171 = vmatpush1.msra.mxu0 0.0
  %172 = vmatprep.subr.mxu0 0.0
  %173 = vmatpush1.msra.mxu0 0.0
  %174 = vmatprep.subr.mxu0 0.0
  %175 = vmatpush1.msra.mxu0 0.0
  %176 = vmatprep.subr.mxu0 0.0
  %177 = vmatpush1.msra.mxu0 0.0
  %178 = vmatprep.subr.mxu0 0.0
  %179 = vmatpush1.msra.mxu0 0.0
  %180 = vmatprep.subr.mxu0 0.0
  %181 = vmatpush1.msra.mxu0 0.0
  %182 = vmatprep.subr.mxu0 0.0
  %183 = vmatpush1.msra.mxu0 0.0
  %184 = vmatprep.subr.mxu0 0.0
  %185 = vmatpush1.msra.mxu0 0.0
  %186 = vmatprep.subr.mxu0 0.0
  %187 = vmatpush1.msra.mxu0 0.0
  %188 = vmatprep.subr.mxu0 0.0
  %189 = vmatpush1.msra.mxu0 0.0
  %190 = vmatprep.subr.mxu0 0.0
  %191 = vmatpush1.msra.mxu0 0.0
  %192 = vmatprep.subr.mxu0 0.0
  %193 = vmatpush1.msra.mxu0 0.0
  %194 = vmatprep.subr.mxu0 0.0
  %195 = vmatpush1.msra.mxu0 0.0
  %196 = vmatprep.subr.mxu0 0.0
  %197 = vmatpush1.msra.mxu0 0.0
  %198 = vmatprep.subr.mxu0 0.0
  %199 = vmatpush1.msra.mxu0 0.0
  %200 = vmatprep.subr.mxu0 0.0
  %201 = vmatpush1.msra.mxu0 0.0
  %202 = vmatprep.subr.mxu0 0.0
  %203 = vmatpush1.msra.mxu0 0.0
  %204 = vmatprep.subr.mxu0 0.0
  %205 = vmatpush1.msra.mxu0 0.0
  %206 = vmatprep.subr.mxu0 0.0
  %207 = vmatpush1.msra.mxu0 0.0
  %208 = vmatprep.subr.mxu0 0.0
  %209 = vmatpush1.msra.mxu0 0.0
  %210 = vmatprep.subr.mxu0 0.0
  %211 = vmatpush1.msra.mxu0 0.0
  %212 = vmatprep.subr.mxu0 0.0
  %213 = vmatpush1.msra.mxu0 0.0
  %214 = vmatprep.subr.mxu0 0.0
  %215 = vmatpush1.msra.mxu0 0.0
  %216 = vmatprep.subr.mxu0 0.0
  %217 = vmatpush1.msra.mxu0 0.0
  %218 = vmatprep.subr.mxu0 0.0
  %219 = vmatpush1.msra.mxu0 0.0
  %220 = vmatprep.subr.mxu0 0.0
  %221 = vmatpush1.msra.mxu0 0.0
  %222 = vmatprep.subr.mxu0 0.0
  %223 = vmatpush1.msra.mxu0 0.0
  %224 = vmatprep.subr.mxu0 0.0
  %225 = vmatpush1.msra.mxu0 0.0
  %226 = vmatprep.subr.mxu0 0.0
  %227 = vmatpush1.msra.mxu0 0.0
  %228 = vmatprep.mubr.f32.mxu0 0.0
  %229 = vmatmul.mubr.f32.gmra.mrb[0].mxu0 %v128
  %v230 = vpop.f32.mrb[0].mxu0
  %v231 = vadd.f32 %v77, %v230
  %v232 = vpop.f32.mrb[0].mxu0
  %233 = vmatprep.mubr.f32.mxu0 0.0
  %234 = vmatmul.mubr.f32.gmra.mrb[0].mxu0 %v130
  %v235 = vpop.f32.mrb[0].mxu0
  %v236 = vadd.f32 %v77, %v235
  %v237 = vpop.f32.mrb[0].mxu0
  %238 = vmatprep.mubr.f32.mxu0 0.0
  %239 = vmatmul.mubr.f32.gmra.mrb[0].mxu0 %v132
  %v240 = vpop.f32.mrb[0].mxu0
  %v241 = vadd.f32 %v77, %v240
  %v242 = vpop.f32.mrb[0].mxu0
  %243 = vmatprep.mubr.f32.mxu0 0.0
  %244 = vmatmul.mubr.f32.gmra.mrb[0].mxu0 %v134
  %v245 = vpop.f32.mrb[0].mxu0
  %v246 = vadd.f32 %v77, %v245
  %v247 = vpop.f32.mrb[0].mxu0
  %248 = vmatprep.mubr.f32.mxu0 0.0
  %249 = vmatmul.mubr.f32.gmra.mrb[0].mxu0 %v136
  %v250 = vpop.f32.mrb[0].mxu0
  %v251 = vadd.f32 %v77, %v250
  %v252 = vpop.f32.mrb[0].mxu0
  %253 = vmatprep.mubr.f32.mxu0 0.0
  %254 = vmatmul.mubr.f32.gmra.mrb[0].mxu0 %v138
  %v255 = vpop.f32.mrb[0].mxu0
  %v256 = vadd.f32 %v77, %v255
  %v257 = vpop.f32.mrb[0].mxu0
  %258 = vmatprep.mubr.f32.mxu0 0.0
  %259 = vmatmul.mubr.f32.gmra.mrb[0].mxu0 %v140
  %v260 = vpop.f32.mrb[0].mxu0
  %v261 = vadd.f32 %v77, %v260
  %v262 = vpop.f32.mrb[0].mxu0
  %263 = vmatprep.mubr.f32.mxu0 0.0
  %264 = vmatmul.mubr.f32.gmra.mrb[0].mxu0 %v142
  %v265 = vpop.f32.mrb[0].mxu0
  %v266 = vadd.f32 %v77, %v265
  %v267 = vpop.f32.mrb[0].mxu0
  %268 = vmatprep.mubr.f32.mxu0 0.0
  %269 = vmatmul.mubr.f32.gmra.mrb[0].mxu0 %v144
  %v270 = vpop.f32.mrb[0].mxu0
  %v271 = vadd.f32 %v77, %v270
  %v272 = vpop.f32.mrb[0].mxu0
  %273 = vmatprep.mubr.f32.mxu0 0.0
  %274 = vmatmul.mubr.f32.gmra.mrb[0].mxu0 %v146
  %v275 = vpop.f32.mrb[0].mxu0
  %v276 = vadd.f32 %v77, %v275
  %v277 = vpop.f32.mrb[0].mxu0
  %278 = vmatprep.mubr.f32.mxu0 0.0
  %279 = vmatmul.mubr.f32.gmra.mrb[0].mxu0 %v148
  %v280 = vpop.f32.mrb[0].mxu0
  %v281 = vadd.f32 %v77, %v280
  %v282 = vpop.f32.mrb[0].mxu0
  %283 = vmatprep.mubr.f32.mxu0 0.0
  %284 = vmatmul.mubr.f32.gmra.mrb[0].mxu0 %v150
  %v285 = vpop.f32.mrb[0].mxu0
  %v286 = vadd.f32 %v77, %v285
  %v287 = vpop.f32.mrb[0].mxu0
  %288 = vmatprep.mubr.f32.mxu0 0.0
  %289 = vmatmul.mubr.f32.gmra.mrb[0].mxu0 %v152
  %v290 = vpop.f32.mrb[0].mxu0
  %v291 = vadd.f32 %v77, %v290
  %v292 = vpop.f32.mrb[0].mxu0
  %293 = vmatprep.mubr.f32.mxu0 0.0
  %294 = vmatmul.mubr.f32.gmra.mrb[0].mxu0 %v154
  %v295 = vpop.f32.mrb[0].mxu0
  %v296 = vadd.f32 %v77, %v295
  %v297 = vpop.f32.mrb[0].mxu0
  %298 = vmatprep.mubr.f32.mxu0 0.0
  %299 = vmatmul.mubr.f32.gmra.mrb[0].mxu0 %v156
  %v300 = vpop.f32.mrb[0].mxu0
  %v301 = vadd.f32 %v77, %v300
  %v302 = vpop.f32.mrb[0].mxu0
  %303 = vmatprep.mubr.f32.mxu0 0.0
  %304 = vmatmul.mubr.f32.gmra.mrb[0].mxu0 %v158
  %v305 = vpop.f32.mrb[0].mxu0
  %v306 = vadd.f32 %v77, %v305
  %v307 = vpop.f32.mrb[0].mxu0
  %308 = vdwg.mxu0
  %v309 = vld [vmem:[%s2] sm:$0xff]
  %v310 = vld [vmem:[%s3] sm:$0xf]
  %vm311 = vcmask 31744
  %v313 = vsel %vm311, %v55, 0
  %v316 = vsel %vm311, %v56, 0
  %v319 = vsel %vm311, %v57, 0
  %v322 = vsel %vm311, %v58, 0
  %v325 = vsel %vm311, %v59, 0
  %v328 = vsel %vm311, %v60, 0
  %v331 = vsel %vm311, %v61, 0
  %v334 = vsel %vm311, %v62, 0
  %v337 = vsel %vm311, %v63, 0
  %v340 = vsel %vm311, %v64, 0
  %v343 = vsel %vm311, %v65, 0
  %v346 = vsel %vm311, %v66, 0
  %v349 = vsel %vm311, %v67, 0
  %v352 = vsel %vm311, %v68, 0
  %v355 = vsel %vm311, %v69, 0
  %v358 = vsel %vm311, %v70, 0
  %vm360 = vcmask 1043456
  %v362 = vsel %vm360, %v310, 0
  %364 = vmatprep.subr.mxu0 0.0
  %365 = vmatpush1.msra.mxu0 %v362
  %366 = vmatprep.subr.mxu0 0.0
  %367 = vmatpush1.msra.mxu0 0.0
  %368 = vmatprep.subr.mxu0 0.0
  %369 = vmatpush1.msra.mxu0 0.0
  %370 = vmatprep.subr.mxu0 0.0
  %371 = vmatpush1.msra.mxu0 0.0
  %372 = vmatprep.subr.mxu0 0.0
  %373 = vmatpush1.msra.mxu0 0.0
  %374 = vmatprep.subr.mxu0 0.0
  %375 = vmatpush1.msra.mxu0 0.0
  %376 = vmatprep.subr.mxu0 0.0
  %377 = vmatpush1.msra.mxu0 0.0
  %378 = vmatprep.subr.mxu0 0.0
  %379 = vmatpush1.msra.mxu0 0.0
  %380 = vmatprep.subr.mxu0 0.0
  %381 = vmatpush1.msra.mxu0 0.0
  %382 = vmatprep.subr.mxu0 0.0
  %383 = vmatpush1.msra.mxu0 0.0
  %384 = vmatprep.subr.mxu0 0.0
  %385 = vmatpush1.msra.mxu0 0.0
  %386 = vmatprep.subr.mxu0 0.0
  %387 = vmatpush1.msra.mxu0 0.0
  %388 = vmatprep.subr.mxu0 0.0
  %389 = vmatpush1.msra.mxu0 0.0
  %390 = vmatprep.subr.mxu0 0.0
  %391 = vmatpush1.msra.mxu0 0.0
  %392 = vmatprep.subr.mxu0 0.0
  %393 = vmatpush1.msra.mxu0 0.0
  %394 = vmatprep.subr.mxu0 0.0
  %395 = vmatpush1.msra.mxu0 0.0
  %396 = vmatprep.subr.mxu0 0.0
  %397 = vmatpush1.msra.mxu0 0.0
  %398 = vmatprep.subr.mxu0 0.0
  %399 = vmatpush1.msra.mxu0 0.0
  %400 = vmatprep.subr.mxu0 0.0
  %401 = vmatpush1.msra.mxu0 0.0
  %402 = vmatprep.subr.mxu0 0.0
  %403 = vmatpush1.msra.mxu0 0.0
  %404 = vmatprep.subr.mxu0 0.0
  %405 = vmatpush1.msra.mxu0 0.0
  %406 = vmatprep.subr.mxu0 0.0
  %407 = vmatpush1.msra.mxu0 0.0
  %408 = vmatprep.subr.mxu0 0.0
  %409 = vmatpush1.msra.mxu0 0.0
  %410 = vmatprep.subr.mxu0 0.0
  %411 = vmatpush1.msra.mxu0 0.0
  %412 = vmatprep.subr.mxu0 0.0
  %413 = vmatpush1.msra.mxu0 0.0
  %414 = vmatprep.subr.mxu0 0.0
  %415 = vmatpush1.msra.mxu0 0.0
  %416 = vmatprep.subr.mxu0 0.0
  %417 = vmatpush1.msra.mxu0 0.0
  %418 = vmatprep.subr.mxu0 0.0
  %419 = vmatpush1.msra.mxu0 0.0
  %420 = vmatprep.subr.mxu0 0.0
  %421 = vmatpush1.msra.mxu0 0.0
  %422 = vmatprep.subr.mxu0 0.0
  %423 = vmatpush1.msra.mxu0 0.0
  %424 = vmatprep.subr.mxu0 0.0
  %425 = vmatpush1.msra.mxu0 0.0
  %426 = vmatprep.subr.mxu0 0.0
  %427 = vmatpush1.msra.mxu0 0.0
  %428 = vmatprep.mubr.f32.mxu0 0.0
  %429 = vmatmul.mubr.f32.gmra.mrb[0].mxu0 %v313
  %v430 = vpop.f32.mrb[0].mxu0
  %v431 = vadd.f32 0.0, %v430
  %v432 = vpop.f32.mrb[0].mxu0
  %433 = vmatprep.mubr.f32.mxu0 0.0
  %434 = vmatmul.mubr.f32.gmra.mrb[0].mxu0 %v316
  %v435 = vpop.f32.mrb[0].mxu0
  %v436 = vadd.f32 0.0, %v435
  %v437 = vpop.f32.mrb[0].mxu0
  %438 = vmatprep.mubr.f32.mxu0 0.0
  %439 = vmatmul.mubr.f32.gmra.mrb[0].mxu0 %v319
  %v440 = vpop.f32.mrb[0].mxu0
  %v441 = vadd.f32 0.0, %v440
  %v442 = vpop.f32.mrb[0].mxu0
  %443 = vmatprep.mubr.f32.mxu0 0.0
  %444 = vmatmul.mubr.f32.gmra.mrb[0].mxu0 %v322
  %v445 = vpop.f32.mrb[0].mxu0
  %v446 = vadd.f32 0.0, %v445
  %v447 = vpop.f32.mrb[0].mxu0
  %448 = vmatprep.mubr.f32.mxu0 0.0
  %449 = vmatmul.mubr.f32.gmra.mrb[0].mxu0 %v325
  %v450 = vpop.f32.mrb[0].mxu0
  %v451 = vadd.f32 0.0, %v450
  %v452 = vpop.f32.mrb[0].mxu0
  %453 = vmatprep.mubr.f32.mxu0 0.0
  %454 = vmatmul.mubr.f32.gmra.mrb[0].mxu0 %v328
  %v455 = vpop.f32.mrb[0].mxu0
  %v456 = vadd.f32 0.0, %v455
  %v457 = vpop.f32.mrb[0].mxu0
  %458 = vmatprep.mubr.f32.mxu0 0.0
  %459 = vmatmul.mubr.f32.gmra.mrb[0].mxu0 %v331
  %v460 = vpop.f32.mrb[0].mxu0
  %v461 = vadd.f32 0.0, %v460
  %v462 = vpop.f32.mrb[0].mxu0
  %463 = vmatprep.mubr.f32.mxu0 0.0
  %464 = vmatmul.mubr.f32.gmra.mrb[0].mxu0 %v334
  %v465 = vpop.f32.mrb[0].mxu0
  %v466 = vadd.f32 0.0, %v465
  %v467 = vpop.f32.mrb[0].mxu0
  %468 = vmatprep.mubr.f32.mxu0 0.0
  %469 = vmatmul.mubr.f32.gmra.mrb[0].mxu0 %v337
  %v470 = vpop.f32.mrb[0].mxu0
  %v471 = vadd.f32 0.0, %v470
  %v472 = vpop.f32.mrb[0].mxu0
  %473 = vmatprep.mubr.f32.mxu0 0.0
  %474 = vmatmul.mubr.f32.gmra.mrb[0].mxu0 %v340
  %v475 = vpop.f32.mrb[0].mxu0
  %v476 = vadd.f32 0.0, %v475
  %v477 = vpop.f32.mrb[0].mxu0
  %478 = vmatprep.mubr.f32.mxu0 0.0
  %479 = vmatmul.mubr.f32.gmra.mrb[0].mxu0 %v343
  %v480 = vpop.f32.mrb[0].mxu0
  %v481 = vadd.f32 0.0, %v480
  %v482 = vpop.f32.mrb[0].mxu0
  %483 = vmatprep.mubr.f32.mxu0 0.0
  %484 = vmatmul.mubr.f32.gmra.mrb[0].mxu0 %v346
  %v485 = vpop.f32.mrb[0].mxu0
  %v486 = vadd.f32 0.0, %v485
  %v487 = vpop.f32.mrb[0].mxu0
  %488 = vmatprep.mubr.f32.mxu0 0.0
  %489 = vmatmul.mubr.f32.gmra.mrb[0].mxu0 %v349
  %v490 = vpop.f32.mrb[0].mxu0
  %v491 = vadd.f32 0.0, %v490
  %v492 = vpop.f32.mrb[0].mxu0
  %493 = vmatprep.mubr.f32.mxu0 0.0
  %494 = vmatmul.mubr.f32.gmra.mrb[0].mxu0 %v352
  %v495 = vpop.f32.mrb[0].mxu0
  %v496 = vadd.f32 0.0, %v495
  %v497 = vpop.f32.mrb[0].mxu0
  %498 = vmatprep.mubr.f32.mxu0 0.0
  %499 = vmatmul.mubr.f32.gmra.mrb[0].mxu0 %v355
  %v500 = vpop.f32.mrb[0].mxu0
  %v501 = vadd.f32 0.0, %v500
  %v502 = vpop.f32.mrb[0].mxu0
  %503 = vmatprep.mubr.f32.mxu0 0.0
  %504 = vmatmul.mubr.f32.gmra.mrb[0].mxu0 %v358
  %v505 = vpop.f32.mrb[0].mxu0
  %v506 = vadd.f32 0.0, %v505
  %v507 = vpop.f32.mrb[0].mxu0
  %508 = vdwg.mxu0
  %vm509 = vcmask 64512
  %v510 = vsel %vm509, %v39, 0
  %v512 = vsel %vm509, %v40, 0
  %v514 = vsel %vm509, %v41, 0
  %v516 = vsel %vm509, %v42, 0
  %v518 = vsel %vm509, %v43, 0
  %v520 = vsel %vm509, %v44, 0
  %v522 = vsel %vm509, %v45, 0
  %v524 = vsel %vm509, %v46, 0
  %v526 = vsel %vm509, %v47, 0
  %v528 = vsel %vm509, %v48, 0
  %v530 = vsel %vm509, %v49, 0
  %v532 = vsel %vm509, %v50, 0
  %v534 = vsel %vm509, %v51, 0
  %v536 = vsel %vm509, %v52, 0
  %v538 = vsel %vm509, %v53, 0
  %v540 = vsel %vm509, %v54, 0
  %542 = vmatprep.subr.mxu0 0.0
  %543 = vmatpush1.msra.mxu0 %v309
  %544 = vmatprep.subr.mxu0 0.0
  %545 = vmatpush1.msra.mxu0 0.0
  %546 = vmatprep.subr.mxu0 0.0
  %547 = vmatpush1.msra.mxu0 0.0
  %548 = vmatprep.subr.mxu0 0.0
  %549 = vmatpush1.msra.mxu0 0.0
  %550 = vmatprep.subr.mxu0 0.0
  %551 = vmatpush1.msra.mxu0 0.0
  %552 = vmatprep.subr.mxu0 0.0
  %553 = vmatpush1.msra.mxu0 0.0
  %554 = vmatprep.subr.mxu0 0.0
  %555 = vmatpush1.msra.mxu0 0.0
  %556 = vmatprep.subr.mxu0 0.0
  %557 = vmatpush1.msra.mxu0 0.0
  %558 = vmatprep.subr.mxu0 0.0
  %559 = vmatpush1.msra.mxu0 0.0
  %560 = vmatprep.subr.mxu0 0.0
  %561 = vmatpush1.msra.mxu0 0.0
  %562 = vmatprep.subr.mxu0 0.0
  %563 = vmatpush1.msra.mxu0 0.0
  %564 = vmatprep.subr.mxu0 0.0
  %565 = vmatpush1.msra.mxu0 0.0
  %566 = vmatprep.subr.mxu0 0.0
  %567 = vmatpush1.msra.mxu0 0.0
  %568 = vmatprep.subr.mxu0 0.0
  %569 = vmatpush1.msra.mxu0 0.0
  %570 = vmatprep.subr.mxu0 0.0
  %571 = vmatpush1.msra.mxu0 0.0
  %572 = vmatprep.subr.mxu0 0.0
  %573 = vmatpush1.msra.mxu0 0.0
  %574 = vmatprep.subr.mxu0 0.0
  %575 = vmatpush1.msra.mxu0 0.0
  %576 = vmatprep.subr.mxu0 0.0
  %577 = vmatpush1.msra.mxu0 0.0
  %578 = vmatprep.subr.mxu0 0.0
  %579 = vmatpush1.msra.mxu0 0.0
  %580 = vmatprep.subr.mxu0 0.0
  %581 = vmatpush1.msra.mxu0 0.0
  %582 = vmatprep.subr.mxu0 0.0
  %583 = vmatpush1.msra.mxu0 0.0
  %584 = vmatprep.subr.mxu0 0.0
  %585 = vmatpush1.msra.mxu0 0.0
  %586 = vmatprep.subr.mxu0 0.0
  %587 = vmatpush1.msra.mxu0 0.0
  %588 = vmatprep.subr.mxu0 0.0
  %589 = vmatpush1.msra.mxu0 0.0
  %590 = vmatprep.subr.mxu0 0.0
  %591 = vmatpush1.msra.mxu0 0.0
  %592 = vmatprep.subr.mxu0 0.0
  %593 = vmatpush1.msra.mxu0 0.0
  %594 = vmatprep.subr.mxu0 0.0
  %595 = vmatpush1.msra.mxu0 0.0
  %596 = vmatprep.subr.mxu0 0.0
  %597 = vmatpush1.msra.mxu0 0.0
  %598 = vmatprep.subr.mxu0 0.0
  %599 = vmatpush1.msra.mxu0 0.0
  %600 = vmatprep.subr.mxu0 0.0
  %601 = vmatpush1.msra.mxu0 0.0
  %602 = vmatprep.subr.mxu0 0.0
  %603 = vmatpush1.msra.mxu0 0.0
  %604 = vmatprep.subr.mxu0 0.0
  %605 = vmatpush1.msra.mxu0 0.0
  %606 = vmatprep.mubr.f32.mxu0 0.0
  %607 = vmatmul.mubr.f32.gmra.mrb[0].mxu0 %v510
  %v608 = vpop.f32.mrb[0].mxu0
  %v609 = vadd.f32 %v431, %v608
  %v610 = vpop.f32.mrb[0].mxu0
  %611 = vmatprep.mubr.f32.mxu0 0.0
  %612 = vmatmul.mubr.f32.gmra.mrb[0].mxu0 %v512
  %v613 = vpop.f32.mrb[0].mxu0
  %v614 = vadd.f32 %v436, %v613
  %v615 = vpop.f32.mrb[0].mxu0
  %616 = vmatprep.mubr.f32.mxu0 0.0
  %617 = vmatmul.mubr.f32.gmra.mrb[0].mxu0 %v514
  %v618 = vpop.f32.mrb[0].mxu0
  %v619 = vadd.f32 %v441, %v618
  %v620 = vpop.f32.mrb[0].mxu0
  %621 = vmatprep.mubr.f32.mxu0 0.0
  %622 = vmatmul.mubr.f32.gmra.mrb[0].mxu0 %v516
  %v623 = vpop.f32.mrb[0].mxu0
  %v624 = vadd.f32 %v446, %v623
  %v625 = vpop.f32.mrb[0].mxu0
  %626 = vmatprep.mubr.f32.mxu0 0.0
  %627 = vmatmul.mubr.f32.gmra.mrb[0].mxu0 %v518
  %v628 = vpop.f32.mrb[0].mxu0
  %v629 = vadd.f32 %v451, %v628
  %v630 = vpop.f32.mrb[0].mxu0
  %631 = vmatprep.mubr.f32.mxu0 0.0
  %632 = vmatmul.mubr.f32.gmra.mrb[0].mxu0 %v520
  %v633 = vpop.f32.mrb[0].mxu0
  %v634 = vadd.f32 %v456, %v633
  %v635 = vpop.f32.mrb[0].mxu0
  %636 = vmatprep.mubr.f32.mxu0 0.0
  %637 = vmatmul.mubr.f32.gmra.mrb[0].mxu0 %v522
  %v638 = vpop.f32.mrb[0].mxu0
  %v639 = vadd.f32 %v461, %v638
  %v640 = vpop.f32.mrb[0].mxu0
  %641 = vmatprep.mubr.f32.mxu0 0.0
  %642 = vmatmul.mubr.f32.gmra.mrb[0].mxu0 %v524
  %v643 = vpop.f32.mrb[0].mxu0
  %v644 = vadd.f32 %v466, %v643
  %v645 = vpop.f32.mrb[0].mxu0
  %646 = vmatprep.mubr.f32.mxu0 0.0
  %647 = vmatmul.mubr.f32.gmra.mrb[0].mxu0 %v526
  %v648 = vpop.f32.mrb[0].mxu0
  %v649 = vadd.f32 %v471, %v648
  %v650 = vpop.f32.mrb[0].mxu0
  %651 = vmatprep.mubr.f32.mxu0 0.0
  %652 = vmatmul.mubr.f32.gmra.mrb[0].mxu0 %v528
  %v653 = vpop.f32.mrb[0].mxu0
  %v654 = vadd.f32 %v476, %v653
  %v655 = vpop.f32.mrb[0].mxu0
  %656 = vmatprep.mubr.f32.mxu0 0.0
  %657 = vmatmul.mubr.f32.gmra.mrb[0].mxu0 %v530
  %v658 = vpop.f32.mrb[0].mxu0
  %v659 = vadd.f32 %v481, %v658
  %v660 = vpop.f32.mrb[0].mxu0
  %661 = vmatprep.mubr.f32.mxu0 0.0
  %662 = vmatmul.mubr.f32.gmra.mrb[0].mxu0 %v532
  %v663 = vpop.f32.mrb[0].mxu0
  %v664 = vadd.f32 %v486, %v663
  %v665 = vpop.f32.mrb[0].mxu0
  %666 = vmatprep.mubr.f32.mxu0 0.0
  %667 = vmatmul.mubr.f32.gmra.mrb[0].mxu0 %v534
  %v668 = vpop.f32.mrb[0].mxu0
  %v669 = vadd.f32 %v491, %v668
  %v670 = vpop.f32.mrb[0].mxu0
  %671 = vmatprep.mubr.f32.mxu0 0.0
  %672 = vmatmul.mubr.f32.gmra.mrb[0].mxu0 %v536
  %v673 = vpop.f32.mrb[0].mxu0
  %v674 = vadd.f32 %v496, %v673
  %v675 = vpop.f32.mrb[0].mxu0
  %676 = vmatprep.mubr.f32.mxu0 0.0
  %677 = vmatmul.mubr.f32.gmra.mrb[0].mxu0 %v538
  %v678 = vpop.f32.mrb[0].mxu0
  %v679 = vadd.f32 %v501, %v678
  %v680 = vpop.f32.mrb[0].mxu0
  %681 = vmatprep.mubr.f32.mxu0 0.0
  %682 = vmatmul.mubr.f32.gmra.mrb[0].mxu0 %v540
  %v683 = vpop.f32.mrb[0].mxu0
  %v684 = vadd.f32 %v506, %v683
  %v685 = vpop.f32.mrb[0].mxu0
  %686 = vdwg.mxu0
  %v687 = vld [vmem:[%s4] sm:$0x1]
  %v689 = vlaneseq
  %v690 = vshrl.u32 %v689, 7
  %v691 = vsub.s32 0, %v690
  %v692 = vrot.slane %v687, %v691
  %v694 = vadd.f32 %v609, %v692
  %v695 = vadd.f32 %v614, %v692
  %v696 = vadd.f32 %v619, %v692
  %v697 = vadd.f32 %v624, %v692
  %v698 = vadd.f32 %v629, %v692
  %v699 = vadd.f32 %v634, %v692
  %v700 = vadd.f32 %v639, %v692
  %v701 = vadd.f32 %v644, %v692
  %v702 = vadd.f32 %v649, %v692
  %v703 = vadd.f32 %v654, %v692
  %v704 = vadd.f32 %v659, %v692
  %v705 = vadd.f32 %v664, %v692
  %v706 = vadd.f32 %v669, %v692
  %v707 = vadd.f32 %v674, %v692
  %v708 = vadd.f32 %v679, %v692
  %v709 = vadd.f32 %v684, %v692
  %v710 = vmul.f32 %v694, %v231
  %v711 = vmul.f32 %v695, %v236
  %v712 = vmul.f32 %v696, %v241
  %v713 = vmul.f32 %v697, %v246
  %v714 = vmul.f32 %v698, %v251
  %v715 = vmul.f32 %v699, %v256
  %v716 = vmul.f32 %v700, %v261
  %v717 = vmul.f32 %v701, %v266
  %v718 = vmul.f32 %v702, %v271
  %v719 = vmul.f32 %v703, %v276
  %v720 = vmul.f32 %v704, %v281
  %v721 = vmul.f32 %v705, %v286
  %v722 = vmul.f32 %v706, %v291
  %v723 = vmul.f32 %v707, %v296
  %v724 = vmul.f32 %v708, %v301
  %v725 = vmul.f32 %v709, %v306
  %742 = vrot.lane.b32.xlu0 %v231, 96
  %v743 = vpop.permute.xlu0 %742
  %744 = vrot.lane.b32.xlu0 %v236, 96
  %v745 = vpop.permute.xlu0 %744
  %746 = vrot.lane.b32.xlu0 %v241, 96
  %v747 = vpop.permute.xlu0 %746
  %748 = vrot.lane.b32.xlu0 %v246, 96
  %v749 = vpop.permute.xlu0 %748
  %750 = vrot.lane.b32.xlu0 %v251, 96
  %v751 = vpop.permute.xlu0 %750
  %752 = vrot.lane.b32.xlu0 %v256, 96
  %v753 = vpop.permute.xlu0 %752
  %754 = vrot.lane.b32.xlu0 %v261, 96
  %v755 = vpop.permute.xlu0 %754
  %756 = vrot.lane.b32.xlu0 %v266, 96
  %v757 = vpop.permute.xlu0 %756
  %758 = vrot.lane.b32.xlu0 %v271, 96
  %v759 = vpop.permute.xlu0 %758
  %760 = vrot.lane.b32.xlu0 %v276, 96
  %v761 = vpop.permute.xlu0 %760
  %762 = vrot.lane.b32.xlu0 %v281, 96
  %v763 = vpop.permute.xlu0 %762
  %764 = vrot.lane.b32.xlu0 %v286, 96
  %v765 = vpop.permute.xlu0 %764
  %766 = vrot.lane.b32.xlu0 %v291, 96
  %v767 = vpop.permute.xlu0 %766
  %768 = vrot.lane.b32.xlu0 %v296, 96
  %v769 = vpop.permute.xlu0 %768
  %770 = vrot.lane.b32.xlu0 %v301, 96
  %v771 = vpop.permute.xlu0 %770
  %772 = vrot.lane.b32.xlu0 %v306, 96
  %v773 = vpop.permute.xlu0 %772
  %v790 = vadd.f32 %v710, %v743
  %v791 = vadd.f32 %v711, %v745
  %v792 = vadd.f32 %v712, %v747
  %v793 = vadd.f32 %v713, %v749
  %v794 = vadd.f32 %v714, %v751
  %v795 = vadd.f32 %v715, %v753
  %v796 = vadd.f32 %v716, %v755
  %v797 = vadd.f32 %v717, %v757
  %v798 = vadd.f32 %v718, %v759
  %v799 = vadd.f32 %v719, %v761
  %v800 = vadd.f32 %v720, %v763
  %v801 = vadd.f32 %v721, %v765
  %v802 = vadd.f32 %v722, %v767
  %v803 = vadd.f32 %v723, %v769
  %v804 = vadd.f32 %v724, %v771
  %v805 = vadd.f32 %v725, %v773
  %v806 = vmax.f32 %v790, 0.0
  %v807 = vmax.f32 %v791, 0.0
  %v808 = vmax.f32 %v792, 0.0
  %v809 = vmax.f32 %v793, 0.0
  %v810 = vmax.f32 %v794, 0.0
  %v811 = vmax.f32 %v795, 0.0
  %v812 = vmax.f32 %v796, 0.0
  %v813 = vmax.f32 %v797, 0.0
  %v814 = vmax.f32 %v798, 0.0
  %v815 = vmax.f32 %v799, 0.0
  %v816 = vmax.f32 %v800, 0.0
  %v817 = vmax.f32 %v801, 0.0
  %v818 = vmax.f32 %v802, 0.0
  %v819 = vmax.f32 %v803, 0.0
  %v820 = vmax.f32 %v804, 0.0
  %v821 = vmax.f32 %v805, 0.0
  %v822 = vld [vmem:[%s7] sm:$0xff]
  %v823 = vld [vmem:[%s7 + $0x8] sm:$0xff]
  %v824 = vld [vmem:[%s7 + $0x10] sm:$0xff]
  %v825 = vld [vmem:[%s7 + $0x18] sm:$0xff]
  %v826 = vld [vmem:[%s8] sm:$0x1]
  %v828 = vlaneseq
  %v829 = vshrl.u32 %v828, 7
  %v830 = vsub.s32 0, %v829
  %v831 = vrot.slane %v826, %v830
  %vm833 = vcmask 261120
  %v835 = vsel %vm833, %v806, 0
  %v838 = vsel %vm833, %v807, 0
  %v841 = vsel %vm833, %v808, 0
  %v844 = vsel %vm833, %v809, 0
  %v847 = vsel %vm833, %v810, 0
  %v850 = vsel %vm833, %v811, 0
  %v853 = vsel %vm833, %v812, 0
  %v856 = vsel %vm833, %v813, 0
  %v859 = vsel %vm833, %v814, 0
  %v862 = vsel %vm833, %v815, 0
  %v865 = vsel %vm833, %v816, 0
  %v868 = vsel %vm833, %v817, 0
  %v871 = vsel %vm833, %v818, 0
  %v874 = vsel %vm833, %v819, 0
  %v877 = vsel %vm833, %v820, 0
  %v880 = vsel %vm833, %v821, 0
  %882 = vmatprep.subr.mxu0 0.0
  %883 = vmatpush1.msra.mxu0 %v822
  %884 = vmatprep.subr.mxu0 0.0
  %885 = vmatpush1.msra.mxu0 %v823
  %886 = vmatprep.subr.mxu0 0.0
  %887 = vmatpush1.msra.mxu0 %v824
  %888 = vmatprep.subr.mxu0 0.0
  %889 = vmatpush1.msra.mxu0 %v825
  %890 = vmatprep.subr.mxu0 0.0
  %891 = vmatpush1.msra.mxu0 0.0
  %892 = vmatprep.subr.mxu0 0.0
  %893 = vmatpush1.msra.mxu0 0.0
  %894 = vmatprep.subr.mxu0 0.0
  %895 = vmatpush1.msra.mxu0 0.0
  %896 = vmatprep.subr.mxu0 0.0
  %897 = vmatpush1.msra.mxu0 0.0
  %898 = vmatprep.subr.mxu0 0.0
  %899 = vmatpush1.msra.mxu0 0.0
  %900 = vmatprep.subr.mxu0 0.0
  %901 = vmatpush1.msra.mxu0 0.0
  %902 = vmatprep.subr.mxu0 0.0
  %903 = vmatpush1.msra.mxu0 0.0
  %904 = vmatprep.subr.mxu0 0.0
  %905 = vmatpush1.msra.mxu0 0.0
  %906 = vmatprep.subr.mxu0 0.0
  %907 = vmatpush1.msra.mxu0 0.0
  %908 = vmatprep.subr.mxu0 0.0
  %909 = vmatpush1.msra.mxu0 0.0
  %910 = vmatprep.subr.mxu0 0.0
  %911 = vmatpush1.msra.mxu0 0.0
  %912 = vmatprep.subr.mxu0 0.0
  %913 = vmatpush1.msra.mxu0 0.0
  %914 = vmatprep.subr.mxu0 0.0
  %915 = vmatpush1.msra.mxu0 0.0
  %916 = vmatprep.subr.mxu0 0.0
  %917 = vmatpush1.msra.mxu0 0.0
  %918 = vmatprep.subr.mxu0 0.0
  %919 = vmatpush1.msra.mxu0 0.0
  %920 = vmatprep.subr.mxu0 0.0
  %921 = vmatpush1.msra.mxu0 0.0
  %922 = vmatprep.subr.mxu0 0.0
  %923 = vmatpush1.msra.mxu0 0.0
  %924 = vmatprep.subr.mxu0 0.0
  %925 = vmatpush1.msra.mxu0 0.0
  %926 = vmatprep.subr.mxu0 0.0
  %927 = vmatpush1.msra.mxu0 0.0
  %928 = vmatprep.subr.mxu0 0.0
  %929 = vmatpush1.msra.mxu0 0.0
  %930 = vmatprep.subr.mxu0 0.0
  %931 = vmatpush1.msra.mxu0 0.0
  %932 = vmatprep.subr.mxu0 0.0
  %933 = vmatpush1.msra.mxu0 0.0
  %934 = vmatprep.subr.mxu0 0.0
  %935 = vmatpush1.msra.mxu0 0.0
  %936 = vmatprep.subr.mxu0 0.0
  %937 = vmatpush1.msra.mxu0 0.0
  %938 = vmatprep.subr.mxu0 0.0
  %939 = vmatpush1.msra.mxu0 0.0
  %940 = vmatprep.subr.mxu0 0.0
  %941 = vmatpush1.msra.mxu0 0.0
  %942 = vmatprep.subr.mxu0 0.0
  %943 = vmatpush1.msra.mxu0 0.0
  %944 = vmatprep.subr.mxu0 0.0
  %945 = vmatpush1.msra.mxu0 0.0
  %946 = vmatprep.mubr.f32.mxu0 0.0
  %947 = vmatmul.mubr.f32.gmra.mrb[0].mxu0 %v835
  %v948 = vpop.f32.mrb[0].mxu0
  %v949 = vadd.f32 %v831, %v948
  %v950 = vpop.f32.mrb[0].mxu0
  %951 = vmatprep.mubr.f32.mxu0 0.0
  %952 = vmatmul.mubr.f32.gmra.mrb[0].mxu0 %v838
  %v953 = vpop.f32.mrb[0].mxu0
  %v954 = vadd.f32 %v831, %v953
  %v955 = vpop.f32.mrb[0].mxu0
  %956 = vmatprep.mubr.f32.mxu0 0.0
  %957 = vmatmul.mubr.f32.gmra.mrb[0].mxu0 %v841
  %v958 = vpop.f32.mrb[0].mxu0
  %v959 = vadd.f32 %v831, %v958
  %v960 = vpop.f32.mrb[0].mxu0
  %961 = vmatprep.mubr.f32.mxu0 0.0
  %962 = vmatmul.mubr.f32.gmra.mrb[0].mxu0 %v844
  %v963 = vpop.f32.mrb[0].mxu0
  %v964 = vadd.f32 %v831, %v963
  %v965 = vpop.f32.mrb[0].mxu0
  %966 = vmatprep.mubr.f32.mxu0 0.0
  %967 = vmatmul.mubr.f32.gmra.mrb[0].mxu0 %v847
  %v968 = vpop.f32.mrb[0].mxu0
  %v969 = vadd.f32 %v831, %v968
  %v970 = vpop.f32.mrb[0].mxu0
  %971 = vmatprep.mubr.f32.mxu0 0.0
  %972 = vmatmul.mubr.f32.gmra.mrb[0].mxu0 %v850
  %v973 = vpop.f32.mrb[0].mxu0
  %v974 = vadd.f32 %v831, %v973
  %v975 = vpop.f32.mrb[0].mxu0
  %976 = vmatprep.mubr.f32.mxu0 0.0
  %977 = vmatmul.mubr.f32.gmra.mrb[0].mxu0 %v853
  %v978 = vpop.f32.mrb[0].mxu0
  %v979 = vadd.f32 %v831, %v978
  %v980 = vpop.f32.mrb[0].mxu0
  %981 = vmatprep.mubr.f32.mxu0 0.0
  %982 = vmatmul.mubr.f32.gmra.mrb[0].mxu0 %v856
  %v983 = vpop.f32.mrb[0].mxu0
  %v984 = vadd.f32 %v831, %v983
  %v985 = vpop.f32.mrb[0].mxu0
  %986 = vmatprep.mubr.f32.mxu0 0.0
  %987 = vmatmul.mubr.f32.gmra.mrb[0].mxu0 %v859
  %v988 = vpop.f32.mrb[0].mxu0
  %v989 = vadd.f32 %v831, %v988
  %v990 = vpop.f32.mrb[0].mxu0
  %991 = vmatprep.mubr.f32.mxu0 0.0
  %992 = vmatmul.mubr.f32.gmra.mrb[0].mxu0 %v862
  %v993 = vpop.f32.mrb[0].mxu0
  %v994 = vadd.f32 %v831, %v993
  %v995 = vpop.f32.mrb[0].mxu0
  %996 = vmatprep.mubr.f32.mxu0 0.0
  %997 = vmatmul.mubr.f32.gmra.mrb[0].mxu0 %v865
  %v998 = vpop.f32.mrb[0].mxu0
  %v999 = vadd.f32 %v831, %v998
  %v1000 = vpop.f32.mrb[0].mxu0
  %1001 = vmatprep.mubr.f32.mxu0 0.0
  %1002 = vmatmul.mubr.f32.gmra.mrb[0].mxu0 %v868
  %v1003 = vpop.f32.mrb[0].mxu0
  %v1004 = vadd.f32 %v831, %v1003
  %v1005 = vpop.f32.mrb[0].mxu0
  %1006 = vmatprep.mubr.f32.mxu0 0.0
  %1007 = vmatmul.mubr.f32.gmra.mrb[0].mxu0 %v871
  %v1008 = vpop.f32.mrb[0].mxu0
  %v1009 = vadd.f32 %v831, %v1008
  %v1010 = vpop.f32.mrb[0].mxu0
  %1011 = vmatprep.mubr.f32.mxu0 0.0
  %1012 = vmatmul.mubr.f32.gmra.mrb[0].mxu0 %v874
  %v1013 = vpop.f32.mrb[0].mxu0
  %v1014 = vadd.f32 %v831, %v1013
  %v1015 = vpop.f32.mrb[0].mxu0
  %1016 = vmatprep.mubr.f32.mxu0 0.0
  %1017 = vmatmul.mubr.f32.gmra.mrb[0].mxu0 %v877
  %v1018 = vpop.f32.mrb[0].mxu0
  %v1019 = vadd.f32 %v831, %v1018
  %v1020 = vpop.f32.mrb[0].mxu0
  %1021 = vmatprep.mubr.f32.mxu0 0.0
  %1022 = vmatmul.mubr.f32.gmra.mrb[0].mxu0 %v880
  %v1023 = vpop.f32.mrb[0].mxu0
  %v1024 = vadd.f32 %v831, %v1023
  %v1025 = vpop.f32.mrb[0].mxu0
  %1026 = vdwg.mxu0
  %1027 = vrot.lane.b32.xlu0 %v231, 64
  %v1028 = vpop.permute.xlu0 %1027
  %1029 = vrot.lane.b32.xlu0 %v236, 64
  %v1030 = vpop.permute.xlu0 %1029
  %1031 = vrot.lane.b32.xlu0 %v241, 64
  %v1032 = vpop.permute.xlu0 %1031
  %1033 = vrot.lane.b32.xlu0 %v246, 64
  %v1034 = vpop.permute.xlu0 %1033
  %1035 = vrot.lane.b32.xlu0 %v251, 64
  %v1036 = vpop.permute.xlu0 %1035
  %1037 = vrot.lane.b32.xlu0 %v256, 64
  %v1038 = vpop.permute.xlu0 %1037
  %1039 = vrot.lane.b32.xlu0 %v261, 64
  %v1040 = vpop.permute.xlu0 %1039
  %1041 = vrot.lane.b32.xlu0 %v266, 64
  %v1042 = vpop.permute.xlu0 %1041
  %1043 = vrot.lane.b32.xlu0 %v271, 64
  %v1044 = vpop.permute.xlu0 %1043
  %1045 = vrot.lane.b32.xlu0 %v276, 64
  %v1046 = vpop.permute.xlu0 %1045
  %1047 = vrot.lane.b32.xlu0 %v281, 64
  %v1048 = vpop.permute.xlu0 %1047
  %1049 = vrot.lane.b32.xlu0 %v286, 64
  %v1050 = vpop.permute.xlu0 %1049
  %1051 = vrot.lane.b32.xlu0 %v291, 64
  %v1052 = vpop.permute.xlu0 %1051
  %1053 = vrot.lane.b32.xlu0 %v296, 64
  %v1054 = vpop.permute.xlu0 %1053
  %1055 = vrot.lane.b32.xlu0 %v301, 64
  %v1056 = vpop.permute.xlu0 %1055
  %1057 = vrot.lane.b32.xlu0 %v306, 64
  %v1058 = vpop.permute.xlu0 %1057
  %v1075 = vmul.f32 %v949, %v1028
  %v1076 = vmul.f32 %v954, %v1030
  %v1077 = vmul.f32 %v959, %v1032
  %v1078 = vmul.f32 %v964, %v1034
  %v1079 = vmul.f32 %v969, %v1036
  %v1080 = vmul.f32 %v974, %v1038
  %v1081 = vmul.f32 %v979, %v1040
  %v1082 = vmul.f32 %v984, %v1042
  %v1083 = vmul.f32 %v989, %v1044
  %v1084 = vmul.f32 %v994, %v1046
  %v1085 = vmul.f32 %v999, %v1048
  %v1086 = vmul.f32 %v1004, %v1050
  %v1087 = vmul.f32 %v1009, %v1052
  %v1088 = vmul.f32 %v1014, %v1054
  %v1089 = vmul.f32 %v1019, %v1056
  %v1090 = vmul.f32 %v1024, %v1058
  %1091 = vrot.lane.b32.xlu0 %v231, 32
  %v1092 = vpop.permute.xlu0 %1091
  %1093 = vrot.lane.b32.xlu0 %v236, 32
  %v1094 = vpop.permute.xlu0 %1093
  %1095 = vrot.lane.b32.xlu0 %v241, 32
  %v1096 = vpop.permute.xlu0 %1095
  %1097 = vrot.lane.b32.xlu0 %v246, 32
  %v1098 = vpop.permute.xlu0 %1097
  %1099 = vrot.lane.b32.xlu0 %v251, 32
  %v1100 = vpop.permute.xlu0 %1099
  %1101 = vrot.lane.b32.xlu0 %v256, 32
  %v1102 = vpop.permute.xlu0 %1101
  %1103 = vrot.lane.b32.xlu0 %v261, 32
  %v1104 = vpop.permute.xlu0 %1103
  %1105 = vrot.lane.b32.xlu0 %v266, 32
  %v1106 = vpop.permute.xlu0 %1105
  %1107 = vrot.lane.b32.xlu0 %v271, 32
  %v1108 = vpop.permute.xlu0 %1107
  %1109 = vrot.lane.b32.xlu0 %v276, 32
  %v1110 = vpop.permute.xlu0 %1109
  %1111 = vrot.lane.b32.xlu0 %v281, 32
  %v1112 = vpop.permute.xlu0 %1111
  %1113 = vrot.lane.b32.xlu0 %v286, 32
  %v1114 = vpop.permute.xlu0 %1113
  %1115 = vrot.lane.b32.xlu0 %v291, 32
  %v1116 = vpop.permute.xlu0 %1115
  %1117 = vrot.lane.b32.xlu0 %v296, 32
  %v1118 = vpop.permute.xlu0 %1117
  %1119 = vrot.lane.b32.xlu0 %v301, 32
  %v1120 = vpop.permute.xlu0 %1119
  %1121 = vrot.lane.b32.xlu0 %v306, 32
  %v1122 = vpop.permute.xlu0 %1121
  %v1139 = vadd.f32 %v1075, %v1092
  %v1140 = vadd.f32 %v1076, %v1094
  %v1141 = vadd.f32 %v1077, %v1096
  %v1142 = vadd.f32 %v1078, %v1098
  %v1143 = vadd.f32 %v1079, %v1100
  %v1144 = vadd.f32 %v1080, %v1102
  %v1145 = vadd.f32 %v1081, %v1104
  %v1146 = vadd.f32 %v1082, %v1106
  %v1147 = vadd.f32 %v1083, %v1108
  %v1148 = vadd.f32 %v1084, %v1110
  %v1149 = vadd.f32 %v1085, %v1112
  %v1150 = vadd.f32 %v1086, %v1114
  %v1151 = vadd.f32 %v1087, %v1116
  %v1152 = vadd.f32 %v1088, %v1118
  %v1153 = vadd.f32 %v1089, %v1120
  %v1154 = vadd.f32 %v1090, %v1122
  %v1155 = vmax.f32 %v1139, 0.0
  %v1156 = vmax.f32 %v1140, 0.0
  %v1157 = vmax.f32 %v1141, 0.0
  %v1158 = vmax.f32 %v1142, 0.0
  %v1159 = vmax.f32 %v1143, 0.0
  %v1160 = vmax.f32 %v1144, 0.0
  %v1161 = vmax.f32 %v1145, 0.0
  %v1162 = vmax.f32 %v1146, 0.0
  %v1163 = vmax.f32 %v1147, 0.0
  %v1164 = vmax.f32 %v1148, 0.0
  %v1165 = vmax.f32 %v1149, 0.0
  %v1166 = vmax.f32 %v1150, 0.0
  %v1167 = vmax.f32 %v1151, 0.0
  %v1168 = vmax.f32 %v1152, 0.0
  %v1169 = vmax.f32 %v1153, 0.0
  %v1170 = vmax.f32 %v1154, 0.0
  %v1171 = vld [vmem:[%s9] sm:$0x1]
  %s1172 = sld [smem:[#allocation2]]
  %v1173 = vstv %s1172
  %v1175 = vsel %vm833, %v1171, 0
  %v1178 = vsel %vm833, %v1155, 0
  %v1181 = vsel %vm833, %v1156, 0
  %v1184 = vsel %vm833, %v1157, 0
  %v1187 = vsel %vm833, %v1158, 0
  %v1190 = vsel %vm833, %v1159, 0
  %v1193 = vsel %vm833, %v1160, 0
  %v1196 = vsel %vm833, %v1161, 0
  %v1199 = vsel %vm833, %v1162, 0
  %v1202 = vsel %vm833, %v1163, 0
  %v1205 = vsel %vm833, %v1164, 0
  %v1208 = vsel %vm833, %v1165, 0
  %v1211 = vsel %vm833, %v1166, 0
  %v1214 = vsel %vm833, %v1167, 0
  %v1217 = vsel %vm833, %v1168, 0
  %v1220 = vsel %vm833, %v1169, 0
  %v1223 = vsel %vm833, %v1170, 0
  %1225 = vmatprep.subr.mxu0 0.0
  %1226 = vmatpush1.xpose.msra.mxu0 %v1178
  %1227 = vmatprep.subr.mxu0 0.0
  %1228 = vmatpush1.xpose.msra.mxu0 %v1181
  %1229 = vmatprep.subr.mxu0 0.0
  %1230 = vmatpush1.xpose.msra.mxu0 %v1184
  %1231 = vmatprep.subr.mxu0 0.0
  %1232 = vmatpush1.xpose.msra.mxu0 %v1187
  %1233 = vmatprep.subr.mxu0 0.0
  %1234 = vmatpush1.xpose.msra.mxu0 %v1190
  %1235 = vmatprep.subr.mxu0 0.0
  %1236 = vmatpush1.xpose.msra.mxu0 %v1193
  %1237 = vmatprep.subr.mxu0 0.0
  %1238 = vmatpush1.xpose.msra.mxu0 %v1196
  %1239 = vmatprep.subr.mxu0 0.0
  %1240 = vmatpush1.xpose.msra.mxu0 %v1199
  %1241 = vmatprep.subr.mxu0 0.0
  %1242 = vmatpush1.xpose.msra.mxu0 %v1202
  %1243 = vmatprep.subr.mxu0 0.0
  %1244 = vmatpush1.xpose.msra.mxu0 %v1205
  %1245 = vmatprep.subr.mxu0 0.0
  %1246 = vmatpush1.xpose.msra.mxu0 %v1208
  %1247 = vmatprep.subr.mxu0 0.0
  %1248 = vmatpush1.xpose.msra.mxu0 %v1211
  %1249 = vmatprep.subr.mxu0 0.0
  %1250 = vmatpush1.xpose.msra.mxu0 %v1214
  %1251 = vmatprep.subr.mxu0 0.0
  %1252 = vmatpush1.xpose.msra.mxu0 %v1217
  %1253 = vmatprep.subr.mxu0 0.0
  %1254 = vmatpush1.xpose.msra.mxu0 %v1220
  %1255 = vmatprep.subr.mxu0 0.0
  %1256 = vmatpush1.xpose.msra.mxu0 %v1223
  %1257 = vmatprep.subr.mxu0 0.0
  %1258 = vmatpush1.xpose.msra.mxu0 0.0
  %1259 = vmatprep.subr.mxu0 0.0
  %1260 = vmatpush1.xpose.msra.mxu0 0.0
  %1261 = vmatprep.subr.mxu0 0.0
  %1262 = vmatpush1.xpose.msra.mxu0 0.0
  %1263 = vmatprep.subr.mxu0 0.0
  %1264 = vmatpush1.xpose.msra.mxu0 0.0
  %1265 = vmatprep.subr.mxu0 0.0
  %1266 = vmatpush1.xpose.msra.mxu0 0.0
  %1267 = vmatprep.subr.mxu0 0.0
  %1268 = vmatpush1.xpose.msra.mxu0 0.0
  %1269 = vmatprep.subr.mxu0 0.0
  %1270 = vmatpush1.xpose.msra.mxu0 0.0
  %1271 = vmatprep.subr.mxu0 0.0
  %1272 = vmatpush1.xpose.msra.mxu0 0.0
  %1273 = vmatprep.subr.mxu0 0.0
  %1274 = vmatpush1.xpose.msra.mxu0 0.0
  %1275 = vmatprep.subr.mxu0 0.0
  %1276 = vmatpush1.xpose.msra.mxu0 0.0
  %1277 = vmatprep.subr.mxu0 0.0
  %1278 = vmatpush1.xpose.msra.mxu0 0.0
  %1279 = vmatprep.subr.mxu0 0.0
  %1280 = vmatpush1.xpose.msra.mxu0 0.0
  %1281 = vmatprep.subr.mxu0 0.0
  %1282 = vmatpush1.xpose.msra.mxu0 0.0
  %1283 = vmatprep.subr.mxu0 0.0
  %1284 = vmatpush1.xpose.msra.mxu0 0.0
  %1285 = vmatprep.subr.mxu0 0.0
  %1286 = vmatpush1.xpose.msra.mxu0 0.0
  %1287 = vmatprep.subr.mxu0 0.0
  %1288 = vmatpush1.xpose.msra.mxu0 0.0
  %1289 = vmatprep.mubr.f32.mxu0 0.0
  %1290 = vmatmul.mubr.f32.gmra.mrb[0].mxu0 %v1175
  %v1291 = vpop.f32.mrb[0].mxu0
  %v1292 = vadd.f32 %v1173, %v1291
  %v1293 = vpop.f32.mrb[0].mxu0
  %1294 = vdwg.mxu0
  %1295 = vst [vmem:[%s11] sm:$0x1] %v1292
  // Predicated region
  $region46: #{soft_q_network_adapter_forward.1} parent=0 // pred_check
    _
  $region47: #{soft_q_network_adapter_forward.1} parent=0 // pred_check_branch
    %1297 = sbr.rel (0) target = $region49
  $region48: #{soft_q_network_adapter_forward.1} parent=0 // pred_region
    _
  $region49: #{soft_q_network_adapter_forward.1} parent=0 // pred_fallthru
    _
  // Predicated region
  $region50: #{soft_q_network_adapter_forward.1} parent=0 // pred_check
    _
  $region51: #{soft_q_network_adapter_forward.1} parent=0 // pred_check_branch
    %1299 = sbr.rel (0) target = $region53
  $region52: #{soft_q_network_adapter_forward.1} parent=0 // pred_region
    _
  $region53: #{soft_q_network_adapter_forward.1} parent=0 // pred_fallthru
    _

</llo_original>
